<compile_context>
chip_gen: v7x
topology: tpu7x:2x2x1
jax: 0.10.0
libtpu: 0.0.40
codegen_flags: <defaults>
</compile_context>

<pallas_src>
import jax
import jax.numpy as jnp
from jax.experimental import pallas as pl
from jax.experimental.pallas import tpu as pltpu

LANE = 128
SUBLANE = 8
DEFAULT_TILE_N = 4096  # rows per grid step; ~10-14 MiB peak VMEM, fits all gens.


def _round_up(n, m):
    return ((n + m - 1) // m) * m


def _cdiv(a, b):
    return (a + b - 1) // b


def _default_act_dtype(compute_dtype):
    """Elementwise dtype: bf16 only on bf16-native VPUs (v6e / v7x)."""
    if jnp.dtype(compute_dtype) == jnp.dtype(jnp.float32):
        return jnp.float32
    try:
        kind = jax.devices()[0].device_kind.lower()
    except Exception:
        kind = ""
    # v5e and older have no native bf16 VPU/EUP -> keep bias/ReLU in f32 there;
    # only the MXU inputs stay low precision.
    if any(tag in kind for tag in ("v2", "v3", "v4", "v5")):
        return jnp.float32
    return compute_dtype


# --------------------------------------------------------------------------
# Kernel
# --------------------------------------------------------------------------
def _make_encoder_kernel(num_hidden):
    """Builds the kernel body for a fixed number of hidden Linear layers."""

    def kernel(*refs):
        (xy_ref, mask_ref, w_in_ref, b_in_ref) = refs[:4]
        hidden_refs = refs[4:4 + 2 * num_hidden]
        w_out_ref, o_ref, acc_ref = refs[4 + 2 * num_hidden:]

        step = pl.program_id(1)  # inner (row-reduction) axis

        @pl.when(step == 0)
        def _init():
            acc_ref[...] = jnp.zeros_like(acc_ref)

        cdt = w_in_ref.dtype  # MXU input dtype (f32 or bf16)
        adt = b_in_ref.dtype  # elementwise (bias / ReLU) dtype

        # Input layer: single K=(x_dim+y_dim) dot; MXU accumulates in f32.
        h = jnp.dot(xy_ref[...], w_in_ref[...],
                    preferred_element_type=jnp.float32)
        h = jnp.maximum(h.astype(adt) + b_in_ref[...], 0)
        # (dropout is identity in eval mode)

        # Hidden layers.
        for k in range(num_hidden):
            w_ref = hidden_refs[2 * k]
            b_ref = hidden_refs[2 * k + 1]
            hk = jnp.dot(h.astype(cdt), w_ref[...],
                         preferred_element_type=jnp.float32)
            h = jnp.maximum(hk.astype(adt) + b_ref[...], 0)

        # Masked row-sum folded into one MXU matvec: (1, TN) @ (TN, H) -> (1, H).
        acc_ref[...] += jnp.dot(mask_ref[...], h.astype(cdt),
                                preferred_element_type=jnp.float32)

        @pl.when(step == pl.num_programs(1) - 1)
        def _finalize():
            # Masked mean commutes with the final Linear, so W_out is applied
            # once per core on the (1, H) partial row-sum.  Normalization by
            # the mask count and the b_out add happen in the wrapper after the
            # tiny cross-core combine.
            r = jnp.dot(acc_ref[...].astype(cdt), w_out_ref[...],
                        preferred_element_type=jnp.float32)  # (1, repr_pad)
            o_ref[...] = jnp.broadcast_to(r[:, None, :], o_ref.shape)

    return kernel


# --------------------------------------------------------------------------
# Parameter preparation (one-time): pad widths to 128, cast dtypes.
# --------------------------------------------------------------------------
def prepare_params(params, compute_dtype=jnp.bfloat16, act_dtype=None):
    if act_dtype is None:
        act_dtype = _default_act_dtype(compute_dtype)

    (w_in, b_in) = params[0]
    hidden = params[1:-1]
    (w_out, b_out) = params[-1]

    def pad_to(w, rows, cols):
        return jnp.pad(w, ((0, rows - w.shape[0]), (0, cols - w.shape[1])))

    h_dims = [w_in.shape[1]] + [w.shape[1] for (w, _) in hidden]
    h_pad = [_round_up(d, LANE) for d in h_dims]
    repr_dim = w_out.shape[1]
    repr_pad = _round_up(repr_dim, LANE)

    w_in_p = pad_to(w_in, w_in.shape[0], h_pad[0]).astype(compute_dtype)
    b_in_p = jnp.pad(b_in, (0, h_pad[0] - b_in.shape[0])
                     ).reshape(1, -1).astype(act_dtype)

    hidden_p = []
    for k, (w, b) in enumerate(hidden):
        wp = pad_to(w, h_pad[k], h_pad[k + 1]).astype(compute_dtype)
        bp = jnp.pad(b, (0, h_pad[k + 1] - b.shape[0])
                     ).reshape(1, -1).astype(act_dtype)
        hidden_p.append((wp, bp))

    w_out_p = pad_to(w_out, h_pad[-1], repr_pad).astype(compute_dtype)
    b_out_p = jnp.pad(b_out, (0, repr_pad - repr_dim)
                      ).reshape(1, -1).astype(jnp.float32)

    return dict(w_in=w_in_p, b_in=b_in_p, hidden=hidden_p,
                w_out=w_out_p, b_out=b_out_p,
                repr_dim=repr_dim, compute_dtype=compute_dtype,
                act_dtype=act_dtype)


# --------------------------------------------------------------------------
# Forward wrapper
# --------------------------------------------------------------------------
def encoder_forward(x, y, valid_idx, prep, *, tile_n=DEFAULT_TILE_N):
    """x: (N, x_dim), y: (N, y_dim), valid_idx: (N, 1) bool.  Returns (1, repr_dim)."""
    n = x.shape[0]
    cdt = prep["compute_dtype"]

    # Single (N, x_dim+y_dim) input: one K=32 MXU dot instead of two K=16 dots.
    xy = jnp.concatenate([x, y], axis=-1).astype(cdt)
    xy_dim = xy.shape[1]

    # ---- Tile / grid sizing -------------------------------------------------
    # Row tile is always lane-aligned (multiple of 128) so the (1, tn) mask
    # block is legal for any multi-step grid; the large default amortizes the
    # ~0.35 us per-step overhead.
    tn = _round_up(max(1, min(tile_n, n)), LANE)
    # If there is enough work for two lane-aligned tiles, split rows across two
    # TensorCores (outer "parallel" axis).  Free on 1-TC chips, ~2x on v7x.
    if n > LANE and _cdiv(n, tn) < 2:
        tn = max(LANE, _round_up(_cdiv(n, 2), LANE))
    total_tiles = _cdiv(n, tn)
    ncores = 2 if total_tiles >= 2 else 1
    steps = _cdiv(total_tiles, ncores)
    n_pad = ncores * steps * tn

    # Zero-pad rows; padded rows carry mask = 0 so they contribute nothing.
    xy_p = jnp.pad(xy, ((0, n_pad - n), (0, 0)))
    # Mask as a lane-major (1, N) row: mask-apply + axis-0 reduce is one matvec.
    mrow = jnp.pad(valid_idx.reshape(1, n).astype(cdt),
                   ((0, 0), (0, n_pad - n)))

    num_hidden = len(prep["hidden"])
    h_last_pad = prep["w_out"].shape[0]
    repr_pad = prep["w_out"].shape[1]

    idx_rows = lambda p, i: (p * steps + i, 0)
    idx_mask = lambda p, i: (0, p * steps + i)
    idx_const = lambda p, i: (0, 0)   # resident across the whole grid (no re-DMA)

    in_specs = [
        pl.BlockSpec((tn, xy_dim), idx_rows),
        pl.BlockSpec((1, tn), idx_mask),
        pl.BlockSpec(prep["w_in"].shape, idx_const),
        pl.BlockSpec(prep["b_in"].shape, idx_const),
    ]
    args = [xy_p, mrow, prep["w_in"], prep["b_in"]]
    for (w, b) in prep["hidden"]:
        in_specs += [pl.BlockSpec(w.shape, idx_const),
                     pl.BlockSpec(b.shape, idx_const)]
        args += [w, b]
    in_specs += [pl.BlockSpec(prep["w_out"].shape, idx_const)]
    args += [prep["w_out"]]

    partial = pl.pallas_call(
        _make_encoder_kernel(num_hidden),
        out_shape=jax.ShapeDtypeStruct((ncores, SUBLANE, repr_pad), jnp.float32),
        grid_spec=pltpu.PrefetchScalarGridSpec(
            num_scalar_prefetch=0,
            grid=(ncores, steps),
            in_specs=in_specs,
            out_specs=pl.BlockSpec((1, SUBLANE, repr_pad),
                                   lambda p, i: (p, 0, 0)),
            scratch_shapes=[pltpu.VMEM((1, h_last_pad), jnp.float32)],
        ),
        compiler_params=pltpu.CompilerParams(
            dimension_semantics=("parallel", "arbitrary"),
            # Conservative limit that fits every generation (v7x has 64 MiB
            # physical VMEM); worst-case footprint at tn=4096 is ~12-14 MiB.
            vmem_limit_bytes=32 * 1024 * 1024,
        ),
    )(*args)

    # Tiny cross-core combine + normalization + bias in the wrapper:
    #   out = (sum_p s_p @ W_out) / count + b_out
    cnt = jnp.sum(valid_idx.astype(jnp.float32))
    # Count clamped to >= 1 (PyTorch would produce NaN/inf for an empty set).
    out = partial[:, 0, :].sum(axis=0, keepdims=True) / jnp.maximum(cnt, 1.0)
    out = out + prep["b_out"]
    return out[:, :prep["repr_dim"]]


# --------------------------------------------------------------------------
# Params + pure-JAX reference
# --------------------------------------------------------------------------
def init_params(key, x_dim, y_dim, hidden_dims, repr_dim):
    """Deterministic synthetic parameters (PyTorch-like uniform fan-in init)."""
    dims_in = [x_dim + y_dim] + list(hidden_dims)
    dims_out = list(hidden_dims) + [repr_dim]
    params = []
    for d_in, d_out in zip(dims_in, dims_out):
        key, kw, kb = jax.random.split(key, 3)
        bound = 1.0 / jnp.sqrt(d_in)
        w = jax.random.uniform(kw, (d_in, d_out), jnp.float32, -bound, bound)
        b = jax.random.uniform(kb, (d_out,), jnp.float32, -bound, bound)
        params.append((w, b))
    return params


def reference_forward(x, y, valid_idx, params):
    """Pure-JAX f32 reference (mirrors the PyTorch forward in eval mode)."""
    h = jnp.concatenate([x, y], axis=-1)
    for (w, b) in params[:-1]:
        h = jax.nn.relu(h @ w + b)
    w_out, b_out = params[-1]
    out = h @ w_out + b_out
    out = jnp.where(valid_idx, out, 0.0)
    return out.sum(axis=0, keepdims=True) / valid_idx.sum()


# --------------------------------------------------------------------------
if __name__ == "__main__":
    x_dim, y_dim = 16, 16
    hidden_dims = [32, 32]
    repr_dim = 32

    key = jax.random.PRNGKey(0)
    k_p, k_rest = jax.random.split(key)
    params = init_params(k_p, x_dim, y_dim, hidden_dims, repr_dim)

    # --- Test 1: module-scale N, f32 compute path, tight tolerance ----------
    k1, k2, k3, k_rest = jax.random.split(k_rest, 4)
    n1 = 8
    x1 = jax.random.normal(k1, (n1, x_dim), jnp.float32)
    y1 = jax.random.normal(k2, (n1, y_dim), jnp.float32)
    m1 = (jax.random.uniform(k3, (n1, 1)) > 0.3).at[0, 0].set(True)

    prep_f32 = prepare_params(params, compute_dtype=jnp.float32)
    out1 = jax.block_until_ready(encoder_forward(x1, y1, m1, prep_f32))
    ref1 = reference_forward(x1, y1, m1, params)
    assert out1.shape == (1, repr_dim)
    assert jnp.allclose(out1, ref1, atol=1e-4, rtol=1e-4), (
        f"f32 max diff {jnp.max(jnp.abs(out1 - ref1))}")

    # --- Test 2: larger N, bf16 MXU path, small tile -> grid (2, 5) ---------
    k1, k2, k3, _ = jax.random.split(k_rest, 4)
    n2 = 5000  # not a tile multiple -> exercises row padding
    x2 = jax.random.normal(k1, (n2, x_dim), jnp.float32)
    y2 = jax.random.normal(k2, (n2, y_dim), jnp.float32)
    m2 = (jax.random.uniform(k3, (n2, 1)) > 0.3).at[0, 0].set(True)

    prep_lp = prepare_params(params, compute_dtype=jnp.bfloat16)
    ref2 = reference_forward(x2, y2, m2, params)

    out2 = jax.block_until_ready(encoder_forward(x2, y2, m2, prep_lp, tile_n=512))
    assert out2.shape == (1, repr_dim)
    assert jnp.allclose(out2, ref2, atol=5e-2, rtol=5e-2), (
        f"bf16 (tile 512) max diff {jnp.max(jnp.abs(out2 - ref2))}")

    # --- Test 3: same inputs, default large tile -> grid (2, 1) -------------
    out3 = jax.block_until_ready(encoder_forward(x2, y2, m2, prep_lp))
    assert out3.shape == (1, repr_dim)
    assert jnp.allclose(out3, ref2, atol=5e-2, rtol=5e-2), (
        f"bf16 (default tile) max diff {jnp.max(jnp.abs(out3 - ref2))}")

    print("KERNEL_OK")
</pallas_src>

<mosaic_0001>
module attributes {stable_mosaic.version = 11 : i64} {
  func.func @kernel(%arg0: i32, %arg1: i32, %arg2: memref<128x32xf32, #tpu.memory_space<vmem>>, %arg3: memref<1x128xf32, #tpu.memory_space<vmem>>, %arg4: memref<32x128xf32, #tpu.memory_space<vmem>>, %arg5: memref<1x128xf32, #tpu.memory_space<vmem>>, %arg6: memref<128x128xf32, #tpu.memory_space<vmem>>, %arg7: memref<1x128xf32, #tpu.memory_space<vmem>>, %arg8: memref<128x128xf32, #tpu.memory_space<vmem>>, %arg9: memref<1x8x128xf32, #tpu.memory_space<vmem>>, %arg10: memref<1x128xf32, #tpu.memory_space<vmem>>) attributes {dimension_semantics = [#tpu.dimension_semantics<parallel>, #tpu.dimension_semantics<arbitrary>], iteration_bounds = array<i64: 1, 1>, scalar_prefetch = 0 : i64, scratch_operands = 1 : i64, tpu.core_type = #tpu.core_type<tc>, window_params = [{transform_indices = @transform_0, window_bounds = array<i64: 128, 32>}, {transform_indices = @transform_1, window_bounds = array<i64: 1, 128>}, {pipeline_mode = #tpu.pipeline_mode<synchronous>, transform_indices = @transform_2, window_bounds = array<i64: 32, 128>}, {pipeline_mode = #tpu.pipeline_mode<synchronous>, transform_indices = @transform_3, window_bounds = array<i64: 1, 128>}, {pipeline_mode = #tpu.pipeline_mode<synchronous>, transform_indices = @transform_4, window_bounds = array<i64: 128, 128>}, {pipeline_mode = #tpu.pipeline_mode<synchronous>, transform_indices = @transform_5, window_bounds = array<i64: 1, 128>}, {pipeline_mode = #tpu.pipeline_mode<synchronous>, transform_indices = @transform_6, window_bounds = array<i64: 128, 128>}, {transform_indices = @transform_7, window_bounds = array<i64: 1, 8, 128>}]} {
    %c0_i32 = arith.constant 0 : i32
    %0 = arith.cmpi eq, %arg1, %c0_i32 : i32
    %1 = arith.extui %0 : i1 to i32
    %c0_i32_0 = arith.constant 0 : i32
    %2 = arith.cmpi ne, %1, %c0_i32_0 : i32
    scf.if %2 {
      %cst_22 = arith.constant 0.000000e+00 : f32
      %26 = vector.broadcast %cst_22 : f32 to vector<1x128xf32>
      %c0_23 = arith.constant 0 : index
      %c0_24 = arith.constant 0 : index
      %27 = vector.load %arg10[%c0_23, %c0_24] : memref<1x128xf32, #tpu.memory_space<vmem>>, vector<1x128xf32>
      tpu.vector_store %arg10[%c0_23, %c0_24], %26 {strides = array<i32>} : memref<1x128xf32, #tpu.memory_space<vmem>>, vector<1x128xf32>,
    } else {
    }
    %c0 = arith.constant 0 : index
    %c0_1 = arith.constant 0 : index
    %3 = vector.load %arg2[%c0, %c0_1] : memref<128x32xf32, #tpu.memory_space<vmem>>, vector<128x32xf32>
    %c0_2 = arith.constant 0 : index
    %c0_3 = arith.constant 0 : index
    %4 = vector.load %arg4[%c0_2, %c0_3] : memref<32x128xf32, #tpu.memory_space<vmem>>, vector<32x128xf32>
    %cst = arith.constant dense<0.000000e+00> : vector<128x128xf32>
    %5 = tpu.matmul %3, %4, %cst {dimension_numbers = #tpu.dot_dimension_numbers<[1], [0], [0], [1], [0, 0, 1, 1], [], []>} : vector<128x32xf32>, vector<32x128xf32>, vector<128x128xf32> -> vector<128x128xf32>
    %c0_4 = arith.constant 0 : index
    %c0_5 = arith.constant 0 : index
    %6 = vector.load %arg5[%c0_4, %c0_5] : memref<1x128xf32, #tpu.memory_space<vmem>>, vector<1x128xf32>
    %7 = vector.broadcast %6 : vector<1x128xf32> to vector<128x128xf32>
    %8 = arith.addf %5, %7 : vector<128x128xf32>
    %cst_6 = arith.constant 0.000000e+00 : f32
    %9 = vector.broadcast %cst_6 : f32 to vector<128x128xf32>
    %10 = arith.maximumf %8, %9 : vector<128x128xf32>
    %c0_7 = arith.constant 0 : index
    %c0_8 = arith.constant 0 : index
    %11 = vector.load %arg6[%c0_7, %c0_8] : memref<128x128xf32, #tpu.memory_space<vmem>>, vector<128x128xf32>
    %cst_9 = arith.constant dense<0.000000e+00> : vector<128x128xf32>
    %12 = tpu.matmul %10, %11, %cst_9 {dimension_numbers = #tpu.dot_dimension_numbers<[1], [0], [0], [1], [0, 0, 1, 1], [], []>} : vector<128x128xf32>, vector<128x128xf32>, vector<128x128xf32> -> vector<128x128xf32>
    %c0_10 = arith.constant 0 : index
    %c0_11 = arith.constant 0 : index
    %13 = vector.load %arg7[%c0_10, %c0_11] : memref<1x128xf32, #tpu.memory_space<vmem>>, vector<1x128xf32>
    %14 = vector.broadcast %13 : vector<1x128xf32> to vector<128x128xf32>
    %15 = arith.addf %12, %14 : vector<128x128xf32>
    %cst_12 = arith.constant 0.000000e+00 : f32
    %16 = vector.broadcast %cst_12 : f32 to vector<128x128xf32>
    %17 = arith.maximumf %15, %16 : vector<128x128xf32>
    %c0_13 = arith.constant 0 : index
    %c0_14 = arith.constant 0 : index
    %18 = vector.load %arg10[%c0_13, %c0_14] : memref<1x128xf32, #tpu.memory_space<vmem>>, vector<1x128xf32>
    %c0_15 = arith.constant 0 : index
    %c0_16 = arith.constant 0 : index
    %19 = vector.load %arg3[%c0_15, %c0_16] : memref<1x128xf32, #tpu.memory_space<vmem>>, vector<1x128xf32>
    %cst_17 = arith.constant dense<0.000000e+00> : vector<1x128xf32>
    %20 = tpu.matmul %19, %17, %cst_17 {dimension_numbers = #tpu.dot_dimension_numbers<[1], [0], [0], [1], [0, 0, 1, 1], [], []>} : vector<1x128xf32>, vector<128x128xf32>, vector<1x128xf32> -> vector<1x128xf32>
    %21 = arith.addf %18, %20 : vector<1x128xf32>
    %c0_18 = arith.constant 0 : index
    %c0_19 = arith.constant 0 : index
    %22 = vector.load %arg10[%c0_18, %c0_19] : memref<1x128xf32, #tpu.memory_space<vmem>>, vector<1x128xf32>
    tpu.vector_store %arg10[%c0_18, %c0_19], %21 {strides = array<i32>} : memref<1x128xf32, #tpu.memory_space<vmem>>, vector<1x128xf32>,
    %c0_i32_20 = arith.constant 0 : i32
    %23 = arith.cmpi eq, %arg1, %c0_i32_20 : i32
    %24 = arith.extui %23 : i1 to i32
    %c0_i32_21 = arith.constant 0 : i32
    %25 = arith.cmpi ne, %24, %c0_i32_21 : i32
    scf.if %25 {
      %c0_22 = arith.constant 0 : index
      %c0_23 = arith.constant 0 : index
      %26 = vector.load %arg10[%c0_22, %c0_23] : memref<1x128xf32, #tpu.memory_space<vmem>>, vector<1x128xf32>
      %c0_24 = arith.constant 0 : index
      %c0_25 = arith.constant 0 : index
      %27 = vector.load %arg8[%c0_24, %c0_25] : memref<128x128xf32, #tpu.memory_space<vmem>>, vector<128x128xf32>
      %cst_26 = arith.constant dense<0.000000e+00> : vector<1x128xf32>
      %28 = tpu.matmul %26, %27, %cst_26 {dimension_numbers = #tpu.dot_dimension_numbers<[1], [0], [0], [1], [0, 0, 1, 1], [], []>} : vector<1x128xf32>, vector<128x128xf32>, vector<1x128xf32> -> vector<1x128xf32>
      %29 = vector.shape_cast %28 : vector<1x128xf32> to vector<1x1x128xf32>
      %30 = vector.shape_cast %29 : vector<1x1x128xf32> to vector<1x1x128xf32>
      %31 = vector.broadcast %30 : vector<1x1x128xf32> to vector<1x8x128xf32>
      %c0_27 = arith.constant 0 : index
      %c0_28 = arith.constant 0 : index
      %c0_29 = arith.constant 0 : index
      %32 = vector.load %arg9[%c0_27, %c0_28, %c0_29] : memref<1x8x128xf32, #tpu.memory_space<vmem>>, vector<1x8x128xf32>
      tpu.vector_store %arg9[%c0_27, %c0_28, %c0_29], %31 {strides = array<i32>} : memref<1x8x128xf32, #tpu.memory_space<vmem>>, vector<1x8x128xf32>,
    } else {
    }
    return
  }
  func.func @transform_0(%arg0: i32, %arg1: i32) -> (i32, i32) {
    %c1_i32 = arith.constant 1 : i32
    %0 = arith.muli %arg0, %c1_i32 : i32
    %1 = arith.addi %0, %arg1 : i32
    %c0_i32 = arith.constant 0 : i32
    %c0_i32_0 = arith.constant 0 : i32
    return %1, %c0_i32 : i32, i32
  }
  func.func @transform_1(%arg0: i32, %arg1: i32) -> (i32, i32) {
    %c1_i32 = arith.constant 1 : i32
    %0 = arith.muli %arg0, %c1_i32 : i32
    %1 = arith.addi %0, %arg1 : i32
    %c0_i32 = arith.constant 0 : i32
    %c0_i32_0 = arith.constant 0 : i32
    return %c0_i32, %1 : i32, i32
  }
  func.func @transform_2(%arg0: i32, %arg1: i32) -> (i32, i32) {
    %c0_i32 = arith.constant 0 : i32
    %c0_i32_0 = arith.constant 0 : i32
    %c0_i32_1 = arith.constant 0 : i32
    return %c0_i32, %c0_i32_0 : i32, i32
  }
  func.func @transform_3(%arg0: i32, %arg1: i32) -> (i32, i32) {
    %c0_i32 = arith.constant 0 : i32
    %c0_i32_0 = arith.constant 0 : i32
    %c0_i32_1 = arith.constant 0 : i32
    return %c0_i32, %c0_i32_0 : i32, i32
  }
  func.func @transform_4(%arg0: i32, %arg1: i32) -> (i32, i32) {
    %c0_i32 = arith.constant 0 : i32
    %c0_i32_0 = arith.constant 0 : i32
    %c0_i32_1 = arith.constant 0 : i32
    return %c0_i32, %c0_i32_0 : i32, i32
  }
  func.func @transform_5(%arg0: i32, %arg1: i32) -> (i32, i32) {
    %c0_i32 = arith.constant 0 : i32
    %c0_i32_0 = arith.constant 0 : i32
    %c0_i32_1 = arith.constant 0 : i32
    return %c0_i32, %c0_i32_0 : i32, i32
  }
  func.func @transform_6(%arg0: i32, %arg1: i32) -> (i32, i32) {
    %c0_i32 = arith.constant 0 : i32
    %c0_i32_0 = arith.constant 0 : i32
    %c0_i32_1 = arith.constant 0 : i32
    return %c0_i32, %c0_i32_0 : i32, i32
  }
  func.func @transform_7(%arg0: i32, %arg1: i32) -> (i32, i32, i32) {
    %c0_i32 = arith.constant 0 : i32
    %c0_i32_0 = arith.constant 0 : i32
    %c0_i32_1 = arith.constant 0 : i32
    return %arg0, %c0_i32, %c0_i32_0 : i32, i32, i32
  }
}

</mosaic_0001>

<llo_original>
// kernel: tpu_custom_call.1
$region0: #{tpu_custom_call.1}
  #allocation0 [shape = 'u32[]', space=smem, size = 0x4, offset = 0x4, fixed_abs, tag = 'smem constant byte address 0x4 - core index']
  #allocation1 [shape = 'u32[144,128]{1,0:T(1,128)}', space=vmem, size = 0x12000, scoped, tag = 'internal scratch']
  #allocation2 [shape = 'f32[1,128]{1,0:T(1,128)}', space=vmem, size = 0x200, scoped, tag = 'scratch operand']
  %s0 = inlined_call_operand.vmem [shape: f32[128,32], index: 0, kind: input, shape index: {}]
  %s1 = inlined_call_operand.vmem [shape: f32[1,128], index: 1, kind: input, shape index: {}]
  %s2 = inlined_call_operand.vmem [shape: f32[32,128], index: 2, kind: input, shape index: {}]
  %s3 = inlined_call_operand.vmem [shape: f32[1,128], index: 3, kind: input, shape index: {}]
  %s4 = inlined_call_operand.vmem [shape: f32[128,128], index: 4, kind: input, shape index: {}]
  %s5 = inlined_call_operand.vmem [shape: f32[1,128], index: 5, kind: input, shape index: {}]
  %s6 = inlined_call_operand.hbm [shape: f32[128,128], index: 6, kind: input, shape index: {}]
  %s7 = inlined_call_operand.hbm [shape: f32[1,8,128], index: 7, kind: output, shape index: {}]
  %s8 = sld [smem:[#allocation0]]
  $region50: #{tpu_custom_call.1} parent=0
    _
  %s10 = ssub.s32 1, %s8
  %s11 = scalar_select 0, %s10, %s8
  $region1: #{tpu_custom_call.1} parent=0
    #allocation3 [shape = 'u8[65536]{0}', space=vmem, size = 0x10000, scoped, tag = 'input window, operand 6, single buffered']
    #allocation4 [shape = 's32[1]{0}', space=sflag, size = 0x4, scoped, tag = 'scoped memory for tpu_custom_call.1']
    #allocation5 [shape = 's32[1]{0}', space=sflag, size = 0x4, scoped, tag = 'scoped memory for tpu_custom_call.1']
    #allocation6 [shape = 'u8[4096]{0}', space=vmem, size = 0x1000, scoped, tag = 'output window, operand 0, single buffered']
    %12 = vsyncpa [#allocation4], 0
    %13 = vsyncpa [#allocation5], 0
    // Predicated region
    $region2: #{tpu_custom_call.1} parent=1 // pred_check
      _
    $region3: #{tpu_custom_call.1} parent=1 // pred_check_branch
      %15 = sbr.rel (0) target = $region5
    $region4: #{tpu_custom_call.1} parent=1 // pred_region
      %s16 = sadd.s32 0, 0
      %s17 = smul.u32 16, %s16
      %p18 = scmp.lt.s32.totalorder %s17, 15
      %s19 = scalar_select %p18, %s17, 15
      %s20 = smul.addr %s19, 8
      %s21 = scalar_lea.vmem %s0, %s20
      %s22 = sadd.s32 0, 0
      %s23 = smul.u32 16, %s22
    $region5: #{tpu_custom_call.1} parent=1 // pred_fallthru
      _
    // Predicated region
    $region6: #{tpu_custom_call.1} parent=1 // pred_check
      _
    $region7: #{tpu_custom_call.1} parent=1 // pred_check_branch
      %25 = sbr.rel (0) target = $region9
    $region8: #{tpu_custom_call.1} parent=1 // pred_region
      %s26 = sadd.s32 0, 0
      %p27 = scmp.lt.s32.totalorder %s26, 0
      %s28 = scalar_select %p27, %s26, 0
      %s29 = scalar_lea.vmem %s1, %s28
      %s30 = sadd.s32 0, 0
    $region9: #{tpu_custom_call.1} parent=1 // pred_fallthru
      _
    // Predicated region
    $region10: #{tpu_custom_call.1} parent=1 // pred_check
      _
    $region11: #{tpu_custom_call.1} parent=1 // pred_check_branch
      %32 = sbr.rel (0) target = $region13
    $region12: #{tpu_custom_call.1} parent=1 // pred_region
      _
    $region13: #{tpu_custom_call.1} parent=1 // pred_fallthru
      _
    // Predicated region
    $region14: #{tpu_custom_call.1} parent=1 // pred_check
      _
    $region15: #{tpu_custom_call.1} parent=1 // pred_check_branch
      %34 = sbr.rel (0) target = $region17
    $region16: #{tpu_custom_call.1} parent=1 // pred_region
      _
    $region17: #{tpu_custom_call.1} parent=1 // pred_fallthru
      _
    // Predicated region
    $region18: #{tpu_custom_call.1} parent=1 // pred_check
      _
    $region19: #{tpu_custom_call.1} parent=1 // pred_check_branch
      %36 = sbr.rel (0) target = $region21
    $region20: #{tpu_custom_call.1} parent=1 // pred_region
      _
    $region21: #{tpu_custom_call.1} parent=1 // pred_fallthru
      _
    // Predicated region
    $region22: #{tpu_custom_call.1} parent=1 // pred_check
      _
    $region23: #{tpu_custom_call.1} parent=1 // pred_check_branch
      %38 = sbr.rel (0) target = $region25
    $region24: #{tpu_custom_call.1} parent=1 // pred_region
      _
    $region25: #{tpu_custom_call.1} parent=1 // pred_fallthru
      _
    // Predicated region
    $region26: #{tpu_custom_call.1} parent=1 // pred_check
      _
    $region27: #{tpu_custom_call.1} parent=1 // pred_check_branch
      %40 = sbr.rel (0) target = $region29
    $region28: #{tpu_custom_call.1} parent=1 // pred_region
      %s42 = ssub.s32 2048, 2048
      %43 = vsyncadd [#allocation4], %s42
      %s44 = sshll.u32 [#allocation3], 4
      %s45 = int_to_ptr.vmem [resolvable:$true] %s44
      %50 = dma.hbm_to_vmem [thread:$0]  %s6, 2048, %s45, [#allocation4], 128, 128, 8
    $region29: #{tpu_custom_call.1} parent=1 // pred_fallthru
      _
    // Predicated region
    $region30: #{tpu_custom_call.1} parent=1 // pred_check
      _
    $region31: #{tpu_custom_call.1} parent=1 // pred_check_branch
      %52 = sbr.rel (0) target = $region33
    $region32: #{tpu_custom_call.1} parent=1 // pred_region
      %53 = dma.done [#allocation4], 2048
    $region33: #{tpu_custom_call.1} parent=1 // pred_fallthru
      _
    %s54 = sadd.s32 0, 0
    %s55 = smul.u32 16, %s54
    %p56 = scmp.lt.s32.totalorder %s55, 15
    %s57 = scalar_select %p56, %s55, 15
    %s58 = smul.addr %s57, 8
    %s59 = scalar_lea.vmem %s0, %s58
    %s60 = sadd.s32 0, 0
    %p61 = scmp.lt.s32.totalorder %s60, 0
    %s62 = scalar_select %p61, %s60, 0
    %s63 = scalar_lea.vmem %s1, %s62
    %s64 = sadd.s32 0, 0
    %s65 = smul.u32 16, %s64
    %p66 = scmp.lt.s32.totalorder %s65, 15
    %s67 = scalar_select %p66, %s65, 15
    %s68 = smul.addr %s67, 8
    %s69 = scalar_lea.vmem %s0, %s68
    %s70 = sadd.s32 0, 0
    %s71 = smul.u32 16, %s70
    %s72 = sadd.s32 0, 0
    %p73 = scmp.lt.s32.totalorder %s72, 0
    %s74 = scalar_select %p73, %s72, 0
    %s75 = scalar_lea.vmem %s1, %s74
    %s76 = sadd.s32 0, 0
    %p77 = scmp.eq.s32.totalorder 0, 0
    // Predicated region
    $region34: #{tpu_custom_call.1} parent=1 // pred_check
      %p78 = pneg %p77
    $region35: #{tpu_custom_call.1} parent=1 // pred_check_branch
      %80 = sbr.rel (%p78) target = $region37
    $region36: #{tpu_custom_call.1} parent=1 // pred_region
      %81 = vst [vmem:[#allocation2] sm:$0x1] 0.0
    $region37: #{tpu_custom_call.1} parent=1 // pred_fallthru
      _
    %v82 = vld [vmem:[%s69] sm:$0xff]
    %v83 = vld [vmem:[%s69 + $0x8] sm:$0xff]
    %v84 = vld [vmem:[%s69 + $0x10] sm:$0xff]
    %v85 = vld [vmem:[%s69 + $0x18] sm:$0xff]
    %v86 = vld [vmem:[%s69 + $0x20] sm:$0xff]
    %v87 = vld [vmem:[%s69 + $0x28] sm:$0xff]
    %v88 = vld [vmem:[%s69 + $0x30] sm:$0xff]
    %v89 = vld [vmem:[%s69 + $0x38] sm:$0xff]
    %v90 = vld [vmem:[%s69 + $0x40] sm:$0xff]
    %v91 = vld [vmem:[%s69 + $0x48] sm:$0xff]
    %v92 = vld [vmem:[%s69 + $0x50] sm:$0xff]
    %v93 = vld [vmem:[%s69 + $0x58] sm:$0xff]
    %v94 = vld [vmem:[%s69 + $0x60] sm:$0xff]
    %v95 = vld [vmem:[%s69 + $0x68] sm:$0xff]
    %v96 = vld [vmem:[%s69 + $0x70] sm:$0xff]
    %v97 = vld [vmem:[%s69 + $0x78] sm:$0xff]
    %v98 = vld [vmem:[%s2] sm:$0xff]
    %v99 = vld [vmem:[%s2 + $0x8] sm:$0xff]
    %v100 = vld [vmem:[%s2 + $0x10] sm:$0xff]
    %v101 = vld [vmem:[%s2 + $0x18] sm:$0xff]
    %v102 = vld [vmem:[%s3] sm:$0x1]
    %v104 = vlaneseq
    %v105 = vshrl.u32 %v104, 7
    %v106 = vsub.s32 0, %v105
    %v107 = vrot.slane %v102, %v106
    %vm109 = vcmask 261120
    %v111 = vsel %vm109, %v82, 0
    %v114 = vsel %vm109, %v83, 0
    %v117 = vsel %vm109, %v84, 0
    %v120 = vsel %vm109, %v85, 0
    %v123 = vsel %vm109, %v86, 0
    %v126 = vsel %vm109, %v87, 0
    %v129 = vsel %vm109, %v88, 0
    %v132 = vsel %vm109, %v89, 0
    %v135 = vsel %vm109, %v90, 0
    %v138 = vsel %vm109, %v91, 0
    %v141 = vsel %vm109, %v92, 0
    %v144 = vsel %vm109, %v93, 0
    %v147 = vsel %vm109, %v94, 0
    %v150 = vsel %vm109, %v95, 0
    %v153 = vsel %vm109, %v96, 0
    %v156 = vsel %vm109, %v97, 0
    %158 = vmatprep.subr.mxu0 0.0
    %159 = vmatpush1.msra.mxu0 %v98
    %160 = vmatprep.subr.mxu0 0.0
    %161 = vmatpush1.msra.mxu0 %v99
    %162 = vmatprep.subr.mxu0 0.0
    %163 = vmatpush1.msra.mxu0 %v100
    %164 = vmatprep.subr.mxu0 0.0
    %165 = vmatpush1.msra.mxu0 %v101
    %166 = vmatprep.subr.mxu0 0.0
    %167 = vmatpush1.msra.mxu0 0.0
    %168 = vmatprep.subr.mxu0 0.0
    %169 = vmatpush1.msra.mxu0 0.0
    %170 = vmatprep.subr.mxu0 0.0
    %171 = vmatpush1.msra.mxu0 0.0
    %172 = vmatprep.subr.mxu0 0.0
    %173 = vmatpush1.msra.mxu0 0.0
    %174 = vmatprep.subr.mxu0 0.0
    %175 = vmatpush1.msra.mxu0 0.0
    %176 = vmatprep.subr.mxu0 0.0
    %177 = vmatpush1.msra.mxu0 0.0
    %178 = vmatprep.subr.mxu0 0.0
    %179 = vmatpush1.msra.mxu0 0.0
    %180 = vmatprep.subr.mxu0 0.0
    %181 = vmatpush1.msra.mxu0 0.0
    %182 = vmatprep.subr.mxu0 0.0
    %183 = vmatpush1.msra.mxu0 0.0
    %184 = vmatprep.subr.mxu0 0.0
    %185 = vmatpush1.msra.mxu0 0.0
    %186 = vmatprep.subr.mxu0 0.0
    %187 = vmatpush1.msra.mxu0 0.0
    %188 = vmatprep.subr.mxu0 0.0
    %189 = vmatpush1.msra.mxu0 0.0
    %190 = vmatprep.subr.mxu0 0.0
    %191 = vmatpush1.msra.mxu0 0.0
    %192 = vmatprep.subr.mxu0 0.0
    %193 = vmatpush1.msra.mxu0 0.0
    %194 = vmatprep.subr.mxu0 0.0
    %195 = vmatpush1.msra.mxu0 0.0
    %196 = vmatprep.subr.mxu0 0.0
    %197 = vmatpush1.msra.mxu0 0.0
    %198 = vmatprep.subr.mxu0 0.0
    %199 = vmatpush1.msra.mxu0 0.0
    %200 = vmatprep.subr.mxu0 0.0
    %201 = vmatpush1.msra.mxu0 0.0
    %202 = vmatprep.subr.mxu0 0.0
    %203 = vmatpush1.msra.mxu0 0.0
    %204 = vmatprep.subr.mxu0 0.0
    %205 = vmatpush1.msra.mxu0 0.0
    %206 = vmatprep.subr.mxu0 0.0
    %207 = vmatpush1.msra.mxu0 0.0
    %208 = vmatprep.subr.mxu0 0.0
    %209 = vmatpush1.msra.mxu0 0.0
    %210 = vmatprep.subr.mxu0 0.0
    %211 = vmatpush1.msra.mxu0 0.0
    %212 = vmatprep.subr.mxu0 0.0
    %213 = vmatpush1.msra.mxu0 0.0
    %214 = vmatprep.subr.mxu0 0.0
    %215 = vmatpush1.msra.mxu0 0.0
    %216 = vmatprep.subr.mxu0 0.0
    %217 = vmatpush1.msra.mxu0 0.0
    %218 = vmatprep.subr.mxu0 0.0
    %219 = vmatpush1.msra.mxu0 0.0
    %220 = vmatprep.subr.mxu0 0.0
    %221 = vmatpush1.msra.mxu0 0.0
    %222 = vmatprep.mubr.f32.mxu0 0.0
    %223 = vmatmul.mubr.f32.gmra.mrb[0].mxu0 %v111
    %v224 = vpop.f32.mrb[0].mxu0
    %v225 = vadd.f32 %v107, %v224
    %v226 = vpop.f32.mrb[0].mxu0
    %227 = vmatprep.mubr.f32.mxu0 0.0
    %228 = vmatmul.mubr.f32.gmra.mrb[0].mxu0 %v114
    %v229 = vpop.f32.mrb[0].mxu0
    %v230 = vadd.f32 %v107, %v229
    %v231 = vpop.f32.mrb[0].mxu0
    %232 = vmatprep.mubr.f32.mxu0 0.0
    %233 = vmatmul.mubr.f32.gmra.mrb[0].mxu0 %v117
    %v234 = vpop.f32.mrb[0].mxu0
    %v235 = vadd.f32 %v107, %v234
    %v236 = vpop.f32.mrb[0].mxu0
    %237 = vmatprep.mubr.f32.mxu0 0.0
    %238 = vmatmul.mubr.f32.gmra.mrb[0].mxu0 %v120
    %v239 = vpop.f32.mrb[0].mxu0
    %v240 = vadd.f32 %v107, %v239
    %v241 = vpop.f32.mrb[0].mxu0
    %242 = vmatprep.mubr.f32.mxu0 0.0
    %243 = vmatmul.mubr.f32.gmra.mrb[0].mxu0 %v123
    %v244 = vpop.f32.mrb[0].mxu0
    %v245 = vadd.f32 %v107, %v244
    %v246 = vpop.f32.mrb[0].mxu0
    %247 = vmatprep.mubr.f32.mxu0 0.0
    %248 = vmatmul.mubr.f32.gmra.mrb[0].mxu0 %v126
    %v249 = vpop.f32.mrb[0].mxu0
    %v250 = vadd.f32 %v107, %v249
    %v251 = vpop.f32.mrb[0].mxu0
    %252 = vmatprep.mubr.f32.mxu0 0.0
    %253 = vmatmul.mubr.f32.gmra.mrb[0].mxu0 %v129
    %v254 = vpop.f32.mrb[0].mxu0
    %v255 = vadd.f32 %v107, %v254
    %v256 = vpop.f32.mrb[0].mxu0
    %257 = vmatprep.mubr.f32.mxu0 0.0
    %258 = vmatmul.mubr.f32.gmra.mrb[0].mxu0 %v132
    %v259 = vpop.f32.mrb[0].mxu0
    %v260 = vadd.f32 %v107, %v259
    %v261 = vpop.f32.mrb[0].mxu0
    %262 = vmatprep.mubr.f32.mxu0 0.0
    %263 = vmatmul.mubr.f32.gmra.mrb[0].mxu0 %v135
    %v264 = vpop.f32.mrb[0].mxu0
    %v265 = vadd.f32 %v107, %v264
    %v266 = vpop.f32.mrb[0].mxu0
    %267 = vmatprep.mubr.f32.mxu0 0.0
    %268 = vmatmul.mubr.f32.gmra.mrb[0].mxu0 %v138
    %v269 = vpop.f32.mrb[0].mxu0
    %v270 = vadd.f32 %v107, %v269
    %v271 = vpop.f32.mrb[0].mxu0
    %272 = vmatprep.mubr.f32.mxu0 0.0
    %273 = vmatmul.mubr.f32.gmra.mrb[0].mxu0 %v141
    %v274 = vpop.f32.mrb[0].mxu0
    %v275 = vadd.f32 %v107, %v274
    %v276 = vpop.f32.mrb[0].mxu0
    %277 = vmatprep.mubr.f32.mxu0 0.0
    %278 = vmatmul.mubr.f32.gmra.mrb[0].mxu0 %v144
    %v279 = vpop.f32.mrb[0].mxu0
    %v280 = vadd.f32 %v107, %v279
    %v281 = vpop.f32.mrb[0].mxu0
    %282 = vmatprep.mubr.f32.mxu0 0.0
    %283 = vmatmul.mubr.f32.gmra.mrb[0].mxu0 %v147
    %v284 = vpop.f32.mrb[0].mxu0
    %v285 = vadd.f32 %v107, %v284
    %v286 = vpop.f32.mrb[0].mxu0
    %287 = vmatprep.mubr.f32.mxu0 0.0
    %288 = vmatmul.mubr.f32.gmra.mrb[0].mxu0 %v150
    %v289 = vpop.f32.mrb[0].mxu0
    %v290 = vadd.f32 %v107, %v289
    %v291 = vpop.f32.mrb[0].mxu0
    %292 = vmatprep.mubr.f32.mxu0 0.0
    %293 = vmatmul.mubr.f32.gmra.mrb[0].mxu0 %v153
    %v294 = vpop.f32.mrb[0].mxu0
    %v295 = vadd.f32 %v107, %v294
    %v296 = vpop.f32.mrb[0].mxu0
    %297 = vmatprep.mubr.f32.mxu0 0.0
    %298 = vmatmul.mubr.f32.gmra.mrb[0].mxu0 %v156
    %v299 = vpop.f32.mrb[0].mxu0
    %v300 = vadd.f32 %v107, %v299
    %v301 = vpop.f32.mrb[0].mxu0
    %302 = vdwg.mxu0
    %v303 = vmax.f32 %v225, 0.0
    %v304 = vmax.f32 %v230, 0.0
    %v305 = vmax.f32 %v235, 0.0
    %v306 = vmax.f32 %v240, 0.0
    %v307 = vmax.f32 %v245, 0.0
    %v308 = vmax.f32 %v250, 0.0
    %v309 = vmax.f32 %v255, 0.0
    %v310 = vmax.f32 %v260, 0.0
    %v311 = vmax.f32 %v265, 0.0
    %v312 = vmax.f32 %v270, 0.0
    %v313 = vmax.f32 %v275, 0.0
    %v314 = vmax.f32 %v280, 0.0
    %v315 = vmax.f32 %v285, 0.0
    %v316 = vmax.f32 %v290, 0.0
    %v317 = vmax.f32 %v295, 0.0
    %v318 = vmax.f32 %v300, 0.0
    %v319 = vld [vmem:[%s4] sm:$0xff]
    %v320 = vld [vmem:[%s4 + $0x8] sm:$0xff]
    %v321 = vld [vmem:[%s4 + $0x10] sm:$0xff]
    %v322 = vld [vmem:[%s4 + $0x18] sm:$0xff]
    %v323 = vld [vmem:[%s4 + $0x20] sm:$0xff]
    %v324 = vld [vmem:[%s4 + $0x28] sm:$0xff]
    %v325 = vld [vmem:[%s4 + $0x30] sm:$0xff]
    %v326 = vld [vmem:[%s4 + $0x38] sm:$0xff]
    %v327 = vld [vmem:[%s4 + $0x40] sm:$0xff]
    %v328 = vld [vmem:[%s4 + $0x48] sm:$0xff]
    %v329 = vld [vmem:[%s4 + $0x50] sm:$0xff]
    %v330 = vld [vmem:[%s4 + $0x58] sm:$0xff]
    %v331 = vld [vmem:[%s4 + $0x60] sm:$0xff]
    %v332 = vld [vmem:[%s4 + $0x68] sm:$0xff]
    %v333 = vld [vmem:[%s4 + $0x70] sm:$0xff]
    %v334 = vld [vmem:[%s4 + $0x78] sm:$0xff]
    %v335 = vld [vmem:[%s5] sm:$0x1]
    %v337 = vlaneseq
    %v338 = vshrl.u32 %v337, 7
    %v339 = vsub.s32 0, %v338
    %v340 = vrot.slane %v335, %v339
    %342 = vmatprep.subr.mxu0 0.0
    %343 = vmatpush1.msra.mxu0 %v319
    %344 = vmatprep.subr.mxu0 0.0
    %345 = vmatpush1.msra.mxu0 %v320
    %346 = vmatprep.subr.mxu0 0.0
    %347 = vmatpush1.msra.mxu0 %v321
    %348 = vmatprep.subr.mxu0 0.0
    %349 = vmatpush1.msra.mxu0 %v322
    %350 = vmatprep.subr.mxu0 0.0
    %351 = vmatpush1.msra.mxu0 %v323
    %352 = vmatprep.subr.mxu0 0.0
    %353 = vmatpush1.msra.mxu0 %v324
    %354 = vmatprep.subr.mxu0 0.0
    %355 = vmatpush1.msra.mxu0 %v325
    %356 = vmatprep.subr.mxu0 0.0
    %357 = vmatpush1.msra.mxu0 %v326
    %358 = vmatprep.subr.mxu0 0.0
    %359 = vmatpush1.msra.mxu0 %v327
    %360 = vmatprep.subr.mxu0 0.0
    %361 = vmatpush1.msra.mxu0 %v328
    %362 = vmatprep.subr.mxu0 0.0
    %363 = vmatpush1.msra.mxu0 %v329
    %364 = vmatprep.subr.mxu0 0.0
    %365 = vmatpush1.msra.mxu0 %v330
    %366 = vmatprep.subr.mxu0 0.0
    %367 = vmatpush1.msra.mxu0 %v331
    %368 = vmatprep.subr.mxu0 0.0
    %369 = vmatpush1.msra.mxu0 %v332
    %370 = vmatprep.subr.mxu0 0.0
    %371 = vmatpush1.msra.mxu0 %v333
    %372 = vmatprep.subr.mxu0 0.0
    %373 = vmatpush1.msra.mxu0 %v334
    %374 = vmatprep.subr.mxu0 0.0
    %375 = vmatpush1.msra.mxu0 0.0
    %376 = vmatprep.subr.mxu0 0.0
    %377 = vmatpush1.msra.mxu0 0.0
    %378 = vmatprep.subr.mxu0 0.0
    %379 = vmatpush1.msra.mxu0 0.0
    %380 = vmatprep.subr.mxu0 0.0
    %381 = vmatpush1.msra.mxu0 0.0
    %382 = vmatprep.subr.mxu0 0.0
    %383 = vmatpush1.msra.mxu0 0.0
    %384 = vmatprep.subr.mxu0 0.0
    %385 = vmatpush1.msra.mxu0 0.0
    %386 = vmatprep.subr.mxu0 0.0
    %387 = vmatpush1.msra.mxu0 0.0
    %388 = vmatprep.subr.mxu0 0.0
    %389 = vmatpush1.msra.mxu0 0.0
    %390 = vmatprep.subr.mxu0 0.0
    %391 = vmatpush1.msra.mxu0 0.0
    %392 = vmatprep.subr.mxu0 0.0
    %393 = vmatpush1.msra.mxu0 0.0
    %394 = vmatprep.subr.mxu0 0.0
    %395 = vmatpush1.msra.mxu0 0.0
    %396 = vmatprep.subr.mxu0 0.0
    %397 = vmatpush1.msra.mxu0 0.0
    %398 = vmatprep.subr.mxu0 0.0
    %399 = vmatpush1.msra.mxu0 0.0
    %400 = vmatprep.subr.mxu0 0.0
    %401 = vmatpush1.msra.mxu0 0.0
    %402 = vmatprep.subr.mxu0 0.0
    %403 = vmatpush1.msra.mxu0 0.0
    %404 = vmatprep.subr.mxu0 0.0
    %405 = vmatpush1.msra.mxu0 0.0
    %406 = vmatprep.mubr.f32.mxu0 0.0
    %407 = vmatmul.mubr.f32.gmra.mrb[0].mxu0 %v303
    %v408 = vpop.f32.mrb[0].mxu0
    %v409 = vadd.f32 %v340, %v408
    %v410 = vpop.f32.mrb[0].mxu0
    %411 = vmatprep.mubr.f32.mxu0 0.0
    %412 = vmatmul.mubr.f32.gmra.mrb[0].mxu0 %v304
    %v413 = vpop.f32.mrb[0].mxu0
    %v414 = vadd.f32 %v340, %v413
    %v415 = vpop.f32.mrb[0].mxu0
    %416 = vmatprep.mubr.f32.mxu0 0.0
    %417 = vmatmul.mubr.f32.gmra.mrb[0].mxu0 %v305
    %v418 = vpop.f32.mrb[0].mxu0
    %v419 = vadd.f32 %v340, %v418
    %v420 = vpop.f32.mrb[0].mxu0
    %421 = vmatprep.mubr.f32.mxu0 0.0
    %422 = vmatmul.mubr.f32.gmra.mrb[0].mxu0 %v306
    %v423 = vpop.f32.mrb[0].mxu0
    %v424 = vadd.f32 %v340, %v423
    %v425 = vpop.f32.mrb[0].mxu0
    %426 = vmatprep.mubr.f32.mxu0 0.0
    %427 = vmatmul.mubr.f32.gmra.mrb[0].mxu0 %v307
    %v428 = vpop.f32.mrb[0].mxu0
    %v429 = vadd.f32 %v340, %v428
    %v430 = vpop.f32.mrb[0].mxu0
    %431 = vmatprep.mubr.f32.mxu0 0.0
    %432 = vmatmul.mubr.f32.gmra.mrb[0].mxu0 %v308
    %v433 = vpop.f32.mrb[0].mxu0
    %v434 = vadd.f32 %v340, %v433
    %v435 = vpop.f32.mrb[0].mxu0
    %436 = vmatprep.mubr.f32.mxu0 0.0
    %437 = vmatmul.mubr.f32.gmra.mrb[0].mxu0 %v309
    %v438 = vpop.f32.mrb[0].mxu0
    %v439 = vadd.f32 %v340, %v438
    %v440 = vpop.f32.mrb[0].mxu0
    %441 = vmatprep.mubr.f32.mxu0 0.0
    %442 = vmatmul.mubr.f32.gmra.mrb[0].mxu0 %v310
    %v443 = vpop.f32.mrb[0].mxu0
    %v444 = vadd.f32 %v340, %v443
    %v445 = vpop.f32.mrb[0].mxu0
    %446 = vmatprep.mubr.f32.mxu0 0.0
    %447 = vmatmul.mubr.f32.gmra.mrb[0].mxu0 %v311
    %v448 = vpop.f32.mrb[0].mxu0
    %v449 = vadd.f32 %v340, %v448
    %v450 = vpop.f32.mrb[0].mxu0
    %451 = vmatprep.mubr.f32.mxu0 0.0
    %452 = vmatmul.mubr.f32.gmra.mrb[0].mxu0 %v312
    %v453 = vpop.f32.mrb[0].mxu0
    %v454 = vadd.f32 %v340, %v453
    %v455 = vpop.f32.mrb[0].mxu0
    %456 = vmatprep.mubr.f32.mxu0 0.0
    %457 = vmatmul.mubr.f32.gmra.mrb[0].mxu0 %v313
    %v458 = vpop.f32.mrb[0].mxu0
    %v459 = vadd.f32 %v340, %v458
    %v460 = vpop.f32.mrb[0].mxu0
    %461 = vmatprep.mubr.f32.mxu0 0.0
    %462 = vmatmul.mubr.f32.gmra.mrb[0].mxu0 %v314
    %v463 = vpop.f32.mrb[0].mxu0
    %v464 = vadd.f32 %v340, %v463
    %v465 = vpop.f32.mrb[0].mxu0
    %466 = vmatprep.mubr.f32.mxu0 0.0
    %467 = vmatmul.mubr.f32.gmra.mrb[0].mxu0 %v315
    %v468 = vpop.f32.mrb[0].mxu0
    %v469 = vadd.f32 %v340, %v468
    %v470 = vpop.f32.mrb[0].mxu0
    %471 = vmatprep.mubr.f32.mxu0 0.0
    %472 = vmatmul.mubr.f32.gmra.mrb[0].mxu0 %v316
    %v473 = vpop.f32.mrb[0].mxu0
    %v474 = vadd.f32 %v340, %v473
    %v475 = vpop.f32.mrb[0].mxu0
    %476 = vmatprep.mubr.f32.mxu0 0.0
    %477 = vmatmul.mubr.f32.gmra.mrb[0].mxu0 %v317
    %v478 = vpop.f32.mrb[0].mxu0
    %v479 = vadd.f32 %v340, %v478
    %v480 = vpop.f32.mrb[0].mxu0
    %481 = vmatprep.mubr.f32.mxu0 0.0
    %482 = vmatmul.mubr.f32.gmra.mrb[0].mxu0 %v318
    %v483 = vpop.f32.mrb[0].mxu0
    %v484 = vadd.f32 %v340, %v483
    %v485 = vpop.f32.mrb[0].mxu0
    %486 = vdwg.mxu0
    %v487 = vmax.f32 %v409, 0.0
    %v488 = vmax.f32 %v414, 0.0
    %v489 = vmax.f32 %v419, 0.0
    %v490 = vmax.f32 %v424, 0.0
    %v491 = vmax.f32 %v429, 0.0
    %v492 = vmax.f32 %v434, 0.0
    %v493 = vmax.f32 %v439, 0.0
    %v494 = vmax.f32 %v444, 0.0
    %v495 = vmax.f32 %v449, 0.0
    %v496 = vmax.f32 %v454, 0.0
    %v497 = vmax.f32 %v459, 0.0
    %v498 = vmax.f32 %v464, 0.0
    %v499 = vmax.f32 %v469, 0.0
    %v500 = vmax.f32 %v474, 0.0
    %v501 = vmax.f32 %v479, 0.0
    %v502 = vmax.f32 %v484, 0.0
    %v503 = vld [vmem:[#allocation2] sm:$0x1]
    %v504 = vld [vmem:[%s75] sm:$0x1]
    %505 = vmatprep.subr.mxu0 0.0
    %506 = vmatpush1.msra.mxu0 %v487
    %507 = vmatprep.subr.mxu0 0.0
    %508 = vmatpush1.msra.mxu0 %v488
    %509 = vmatprep.subr.mxu0 0.0
    %510 = vmatpush1.msra.mxu0 %v489
    %511 = vmatprep.subr.mxu0 0.0
    %512 = vmatpush1.msra.mxu0 %v490
    %513 = vmatprep.subr.mxu0 0.0
    %514 = vmatpush1.msra.mxu0 %v491
    %515 = vmatprep.subr.mxu0 0.0
    %516 = vmatpush1.msra.mxu0 %v492
    %517 = vmatprep.subr.mxu0 0.0
    %518 = vmatpush1.msra.mxu0 %v493
    %519 = vmatprep.subr.mxu0 0.0
    %520 = vmatpush1.msra.mxu0 %v494
    %521 = vmatprep.subr.mxu0 0.0
    %522 = vmatpush1.msra.mxu0 %v495
    %523 = vmatprep.subr.mxu0 0.0
    %524 = vmatpush1.msra.mxu0 %v496
    %525 = vmatprep.subr.mxu0 0.0
    %526 = vmatpush1.msra.mxu0 %v497
    %527 = vmatprep.subr.mxu0 0.0
    %528 = vmatpush1.msra.mxu0 %v498
    %529 = vmatprep.subr.mxu0 0.0
    %530 = vmatpush1.msra.mxu0 %v499
    %531 = vmatprep.subr.mxu0 0.0
    %532 = vmatpush1.msra.mxu0 %v500
    %533 = vmatprep.subr.mxu0 0.0
    %534 = vmatpush1.msra.mxu0 %v501
    %535 = vmatprep.subr.mxu0 0.0
    %536 = vmatpush1.msra.mxu0 %v502
    %537 = vmatprep.subr.mxu0 0.0
    %538 = vmatpush1.msra.mxu0 0.0
    %539 = vmatprep.subr.mxu0 0.0
    %540 = vmatpush1.msra.mxu0 0.0
    %541 = vmatprep.subr.mxu0 0.0
    %542 = vmatpush1.msra.mxu0 0.0
    %543 = vmatprep.subr.mxu0 0.0
    %544 = vmatpush1.msra.mxu0 0.0
    %545 = vmatprep.subr.mxu0 0.0
    %546 = vmatpush1.msra.mxu0 0.0
    %547 = vmatprep.subr.mxu0 0.0
    %548 = vmatpush1.msra.mxu0 0.0
    %549 = vmatprep.subr.mxu0 0.0
    %550 = vmatpush1.msra.mxu0 0.0
    %551 = vmatprep.subr.mxu0 0.0
    %552 = vmatpush1.msra.mxu0 0.0
    %553 = vmatprep.subr.mxu0 0.0
    %554 = vmatpush1.msra.mxu0 0.0
    %555 = vmatprep.subr.mxu0 0.0
    %556 = vmatpush1.msra.mxu0 0.0
    %557 = vmatprep.subr.mxu0 0.0
    %558 = vmatpush1.msra.mxu0 0.0
    %559 = vmatprep.subr.mxu0 0.0
    %560 = vmatpush1.msra.mxu0 0.0
    %561 = vmatprep.subr.mxu0 0.0
    %562 = vmatpush1.msra.mxu0 0.0
    %563 = vmatprep.subr.mxu0 0.0
    %564 = vmatpush1.msra.mxu0 0.0
    %565 = vmatprep.subr.mxu0 0.0
    %566 = vmatpush1.msra.mxu0 0.0
    %567 = vmatprep.subr.mxu0 0.0
    %568 = vmatpush1.msra.mxu0 0.0
    %569 = vmatprep.mubr.f32.mxu0 0.0
    %570 = vmatmul.mubr.f32.gmra.mrb[0].mxu0 %v504
    %v571 = vpop.f32.mrb[0].mxu0
    %v572 = vadd.f32 0.0, %v571
    %v573 = vpop.f32.mrb[0].mxu0
    %574 = vdwg.mxu0
    %v575 = vadd.f32 %v503, %v572
    %576 = vst [vmem:[#allocation2] sm:$0x1] %v575
    // Predicated region
    $region38: #{tpu_custom_call.1} parent=1 // pred_check
      %p577 = pneg %p77
    $region39: #{tpu_custom_call.1} parent=1 // pred_check_branch
      %579 = sbr.rel (%p577) target = $region41
    $region40: #{tpu_custom_call.1} parent=1 // pred_region
      %v580 = vld [vmem:[#allocation2] sm:$0x1]
      %v581 = vld [vmem:[#allocation3] sm:$0xff]
      %v582 = vld [vmem:[#allocation3 + $0x8] sm:$0xff]
      %v583 = vld [vmem:[#allocation3 + $0x10] sm:$0xff]
      %v584 = vld [vmem:[#allocation3 + $0x18] sm:$0xff]
      %v585 = vld [vmem:[#allocation3 + $0x20] sm:$0xff]
      %v586 = vld [vmem:[#allocation3 + $0x28] sm:$0xff]
      %v587 = vld [vmem:[#allocation3 + $0x30] sm:$0xff]
      %v588 = vld [vmem:[#allocation3 + $0x38] sm:$0xff]
      %v589 = vld [vmem:[#allocation3 + $0x40] sm:$0xff]
      %v590 = vld [vmem:[#allocation3 + $0x48] sm:$0xff]
      %v591 = vld [vmem:[#allocation3 + $0x50] sm:$0xff]
      %v592 = vld [vmem:[#allocation3 + $0x58] sm:$0xff]
      %v593 = vld [vmem:[#allocation3 + $0x60] sm:$0xff]
      %v594 = vld [vmem:[#allocation3 + $0x68] sm:$0xff]
      %v595 = vld [vmem:[#allocation3 + $0x70] sm:$0xff]
      %v596 = vld [vmem:[#allocation3 + $0x78] sm:$0xff]
      %597 = vmatprep.subr.mxu0 0.0
      %598 = vmatpush1.msra.mxu0 %v581
      %599 = vmatprep.subr.mxu0 0.0
      %600 = vmatpush1.msra.mxu0 %v582
      %601 = vmatprep.subr.mxu0 0.0
      %602 = vmatpush1.msra.mxu0 %v583
      %603 = vmatprep.subr.mxu0 0.0
      %604 = vmatpush1.msra.mxu0 %v584
      %605 = vmatprep.subr.mxu0 0.0
      %606 = vmatpush1.msra.mxu0 %v585
      %607 = vmatprep.subr.mxu0 0.0
      %608 = vmatpush1.msra.mxu0 %v586
      %609 = vmatprep.subr.mxu0 0.0
      %610 = vmatpush1.msra.mxu0 %v587
      %611 = vmatprep.subr.mxu0 0.0
      %612 = vmatpush1.msra.mxu0 %v588
      %613 = vmatprep.subr.mxu0 0.0
      %614 = vmatpush1.msra.mxu0 %v589
      %615 = vmatprep.subr.mxu0 0.0
      %616 = vmatpush1.msra.mxu0 %v590
      %617 = vmatprep.subr.mxu0 0.0
      %618 = vmatpush1.msra.mxu0 %v591
      %619 = vmatprep.subr.mxu0 0.0
      %620 = vmatpush1.msra.mxu0 %v592
      %621 = vmatprep.subr.mxu0 0.0
      %622 = vmatpush1.msra.mxu0 %v593
      %623 = vmatprep.subr.mxu0 0.0
      %624 = vmatpush1.msra.mxu0 %v594
      %625 = vmatprep.subr.mxu0 0.0
      %626 = vmatpush1.msra.mxu0 %v595
      %627 = vmatprep.subr.mxu0 0.0
      %628 = vmatpush1.msra.mxu0 %v596
      %629 = vmatprep.subr.mxu0 0.0
      %630 = vmatpush1.msra.mxu0 0.0
      %631 = vmatprep.subr.mxu0 0.0
      %632 = vmatpush1.msra.mxu0 0.0
      %633 = vmatprep.subr.mxu0 0.0
      %634 = vmatpush1.msra.mxu0 0.0
      %635 = vmatprep.subr.mxu0 0.0
      %636 = vmatpush1.msra.mxu0 0.0
      %637 = vmatprep.subr.mxu0 0.0
      %638 = vmatpush1.msra.mxu0 0.0
      %639 = vmatprep.subr.mxu0 0.0
      %640 = vmatpush1.msra.mxu0 0.0
      %641 = vmatprep.subr.mxu0 0.0
      %642 = vmatpush1.msra.mxu0 0.0
      %643 = vmatprep.subr.mxu0 0.0
      %644 = vmatpush1.msra.mxu0 0.0
      %645 = vmatprep.subr.mxu0 0.0
      %646 = vmatpush1.msra.mxu0 0.0
      %647 = vmatprep.subr.mxu0 0.0
      %648 = vmatpush1.msra.mxu0 0.0
      %649 = vmatprep.subr.mxu0 0.0
      %650 = vmatpush1.msra.mxu0 0.0
      %651 = vmatprep.subr.mxu0 0.0
      %652 = vmatpush1.msra.mxu0 0.0
      %653 = vmatprep.subr.mxu0 0.0
      %654 = vmatpush1.msra.mxu0 0.0
      %655 = vmatprep.subr.mxu0 0.0
      %656 = vmatpush1.msra.mxu0 0.0
      %657 = vmatprep.subr.mxu0 0.0
      %658 = vmatpush1.msra.mxu0 0.0
      %659 = vmatprep.subr.mxu0 0.0
      %660 = vmatpush1.msra.mxu0 0.0
      %661 = vmatprep.mubr.f32.mxu0 0.0
      %662 = vmatmul.mubr.f32.gmra.mrb[0].mxu0 %v580
      %v663 = vpop.f32.mrb[0].mxu0
      %v664 = vadd.f32 0.0, %v663
      %v665 = vpop.f32.mrb[0].mxu0
      %666 = vdwg.mxu0
      %v667 = vlaneseq
      %v668 = vshrl.u32 %v667, 7
      %v669 = vsub.s32 0, %v668
      %v670 = vrot.slane %v664, %v669
      %671 = vst [vmem:[#allocation6] sm:$0xff] %v670
    $region41: #{tpu_custom_call.1} parent=1 // pred_fallthru
      _
    // Predicated region
    $region42: #{tpu_custom_call.1} parent=1 // pred_check
      _
    $region43: #{tpu_custom_call.1} parent=1 // pred_check_branch
      %673 = sbr.rel (0) target = $region45
    $region44: #{tpu_custom_call.1} parent=1 // pred_region
      %s675 = ssub.s32 128, 128
      %676 = vsyncadd [#allocation5], %s675
      %s678 = sshll.u32 [#allocation6], 4
      %s679 = int_to_ptr.vmem [resolvable:$true] %s678
      %681 = dma.vmem_to_hbm [thread:$0]  %s679, 128, %s7, [#allocation5]
    $region45: #{tpu_custom_call.1} parent=1 // pred_fallthru
      _
    // Predicated region
    $region46: #{tpu_custom_call.1} parent=1 // pred_check
      _
    $region47: #{tpu_custom_call.1} parent=1 // pred_check_branch
      %683 = sbr.rel (0) target = $region49
    $region48: #{tpu_custom_call.1} parent=1 // pred_region
      %684 = dma.done [#allocation5], 128
    $region49: #{tpu_custom_call.1} parent=1 // pred_fallthru
      _
    %685 = vsyncpa [#allocation4], 1
    %686 = vsyncpa [#allocation5], 1

</llo_original>
